<compile_context>
chip_gen: v7x
topology: tpu7x:2x2x1
jax: 0.10.0
libtpu: 0.0.40
codegen_flags: <defaults>
</compile_context>

<pallas_src>
import numpy as np
import jax
import jax.numpy as jnp
from jax.experimental import pallas as pl
from jax.experimental.pallas import tpu as pltpu

N_BATCH = 2
L_IN = 88            # input length so that after the two conv+pool stages L = 19
C1, K1 = 4, 5        # conv1: Conv1d(1, 4, kernel_size=5)
C2, K2 = 8, 5        # conv2: Conv1d(4, 8, kernel_size=5)
L1 = L_IN - K1 + 1   # 84
P1 = L1 // 2         # 42
L2 = P1 - K2 + 1     # 38
P2 = L2 // 2         # 19
HID = 32
OUT = 2

CW1 = C1 * L1        # 336 : conv1 output, lane-packed (col = co*L1 + l)
CW2 = C2 * L2        # 304 : conv2 output, lane-packed (col = co*L2 + l)


def model_kernel(x_ref, w1_ref, w2_ref, b2_ref, wd1_ref, bd1_ref, wd2_ref,
                 bd2_ref, out_ref):
    x = x_ref[...]                                           # (N, 89)  [x | 1.0]

    # conv1 + bias + ReLU  (bias folded into w1 via the ones column of x)
    y1 = jnp.dot(x, w1_ref[...], preferred_element_type=jnp.float32)
    y1 = jnp.maximum(y1, 0.0)                                # (N, 336)

    # MaxPool1d(2,2): pairwise max on full-width rows; the even-column pick is
    # folded (exactly) into w2's rows, so no pooling matmul is needed.
    m1 = jnp.maximum(y1[:, :CW1 - 1], y1[:, 1:])             # (N, 335)

    # conv2 + bias + ReLU  (one banded matmul, cols = co*L2 + l)
    y2 = jnp.dot(m1, w2_ref[...], preferred_element_type=jnp.float32) + b2_ref[...]
    y2 = jnp.maximum(y2, 0.0)                                # (N, 304)

    m2 = jnp.maximum(y2[:, :CW2 - 1], y2[:, 1:])             # (N, 303)

    # fc1: even-pick + channel-major flatten are folded into wd1 -> ONE matmul
    h = jnp.dot(m2, wd1_ref[...], preferred_element_type=jnp.float32) + bd1_ref[...]
    h = jnp.maximum(h, 0.0)                                  # (N, 32)

    # TODO(synk): Dropout(p=0.5) implemented as eval-mode identity (inference parity).
    out_ref[...] = jnp.dot(h, wd2_ref[...], preferred_element_type=jnp.float32) + bd2_ref[...]


def _pack_params(params):
    """Host-side (exact) repacking of the PyTorch parameters into lane-packed
    banded weight matrices consumed by the kernel."""
    w1 = np.asarray(params["conv1_w"], np.float32)           # (C1, 1, K1)
    b1 = np.asarray(params["conv1_b"], np.float32)           # (C1,)
    w2 = np.asarray(params["conv2_w"], np.float32)           # (C2, C1, K2)
    b2 = np.asarray(params["conv2_b"], np.float32)           # (C2,)
    f1w = np.asarray(params["fc1_w"], np.float32)            # (HID, C2*P2)
    f1b = np.asarray(params["fc1_b"], np.float32)            # (HID,)
    f2w = np.asarray(params["fc2_w"], np.float32)            # (OUT, HID)
    f2b = np.asarray(params["fc2_b"], np.float32)            # (OUT,)

    # conv1 as a banded matmul on x_aug = [x | 1]:  y1[n, co*L1+l] =
    #   sum_k x[n, l+k] * w1[co,0,k] + b1[co]
    W1 = np.zeros((L_IN + 1, CW1), np.float32)               # (89, 336)
    for co in range(C1):
        for l in range(L1):
            W1[l:l + K1, co * L1 + l] = w1[co, 0, :]
        W1[L_IN, co * L1:(co + 1) * L1] = b1[co]             # bias via ones column

    # conv2 consumes m1 where m1[:, ci*L1 + 2j] = maxpool(relu(conv1))[:, ci, j];
    # the pooling even-column selection is folded into W2's row indices.
    W2 = np.zeros((CW1 - 1, CW2), np.float32)                # (335, 304)
    for co in range(C2):
        for ci in range(C1):
            for l in range(L2):
                for k in range(K2):
                    W2[ci * L1 + 2 * (l + k), co * L2 + l] = w2[co, ci, k]
    B2 = np.repeat(b2, L2)[None, :].astype(np.float32)       # (1, 304)

    # fc1 consumes m2 where m2[:, co*L2 + 2j] = flat[:, co*P2 + j]
    # (channel-major flatten, identical to PyTorch .view(-1, 8*19)).
    WD1 = np.zeros((CW2 - 1, HID), np.float32)               # (303, 32)
    for co in range(C2):
        for j in range(P2):
            WD1[co * L2 + 2 * j, :] = f1w[:, co * P2 + j]
    BD1 = f1b[None, :]                                        # (1, 32)
    WD2 = f2w.T.copy()                                        # (32, 2)
    BD2 = f2b[None, :]                                        # (1, 2)

    packed = dict(W1=W1, W2=W2, B2=B2, WD1=WD1, BD1=BD1, WD2=WD2, BD2=BD2)
    return {k: jnp.asarray(v) for k, v in packed.items()}


def model_forward(x, params):
    """x: (N, 1, 88) float32 (PyTorch NCL layout)."""
    assert x.shape[1:] == (1, L_IN), f"expected (N, 1, {L_IN}), got {x.shape}"
    n = x.shape[0]
    x2d = jnp.asarray(x, jnp.float32).reshape(n, L_IN)
    # ones column so conv1's bias rides along in W1 (one fewer input / vadd)
    x_aug = jnp.concatenate([x2d, jnp.ones((n, 1), jnp.float32)], axis=1)

    pk = _pack_params(params)

    vmem = pl.BlockSpec(memory_space=pltpu.MemorySpace.VMEM)
    return pl.pallas_call(
        model_kernel,
        out_shape=jax.ShapeDtypeStruct((n, OUT), jnp.float32),
        in_specs=[vmem] * 8,
        out_specs=vmem,
    )(x_aug, pk["W1"], pk["W2"], pk["B2"], pk["WD1"], pk["BD1"],
      pk["WD2"], pk["BD2"])


def ref_forward(x, p):
    """Pure-JAX reference mirroring the PyTorch module (eval mode)."""
    def conv1d(h, w, b):
        nb, cin, L = h.shape
        cout, _, k = w.shape
        lout = L - k + 1
        cols = jnp.stack([h[:, :, i:i + lout] for i in range(k)], axis=-1)  # (N,Cin,Lout,K)
        return jnp.einsum("nclk,ock->nol", cols, w) + b[None, :, None]

    def maxpool2(h):
        nb, c, L = h.shape
        return h[:, :, :(L // 2) * 2].reshape(nb, c, L // 2, 2).max(-1)

    h = maxpool2(jax.nn.relu(conv1d(x, p["conv1_w"], p["conv1_b"])))
    h = maxpool2(jax.nn.relu(conv1d(h, p["conv2_w"], p["conv2_b"])))
    flat = h.reshape(h.shape[0], -1)                                  # (N, 152) channel-major
    d = jax.nn.relu(flat @ p["fc1_w"].T + p["fc1_b"])
    return d @ p["fc2_w"].T + p["fc2_b"]


if __name__ == "__main__":
    key = jax.random.PRNGKey(0)
    kx, k1, k2, k3, k4, k5, k6, k7, k8 = jax.random.split(key, 9)

    x = jax.random.normal(kx, (N_BATCH, 1, L_IN), dtype=jnp.float32)

    params = {
        "conv1_w": 0.2 * jax.random.normal(k1, (C1, 1, K1), dtype=jnp.float32),
        "conv1_b": 0.1 * jax.random.normal(k2, (C1,), dtype=jnp.float32),
        "conv2_w": 0.2 * jax.random.normal(k3, (C2, C1, K2), dtype=jnp.float32),
        "conv2_b": 0.1 * jax.random.normal(k4, (C2,), dtype=jnp.float32),
        "fc1_w": 0.1 * jax.random.normal(k5, (HID, C2 * P2), dtype=jnp.float32),
        "fc1_b": 0.1 * jax.random.normal(k6, (HID,), dtype=jnp.float32),
        "fc2_w": 0.1 * jax.random.normal(k7, (OUT, HID), dtype=jnp.float32),
        "fc2_b": 0.1 * jax.random.normal(k8, (OUT,), dtype=jnp.float32),
    }

    out = model_forward(x, params)
    out = jax.block_until_ready(out)

    ref = jax.block_until_ready(ref_forward(x, params))
    assert out.shape == (N_BATCH, OUT), out.shape
    np.testing.assert_allclose(np.asarray(out), np.asarray(ref), rtol=1e-4, atol=1e-4)

    print("KERNEL_OK")
</pallas_src>

<mosaic_0001>
module attributes {stable_mosaic.version = 11 : i64} {
  func.func @model_kernel(%arg0: memref<2x89xf32, #tpu.memory_space<vmem>>, %arg1: memref<89x336xf32, #tpu.memory_space<vmem>>, %arg2: memref<335x304xf32, #tpu.memory_space<vmem>>, %arg3: memref<1x304xf32, #tpu.memory_space<vmem>>, %arg4: memref<303x32xf32, #tpu.memory_space<vmem>>, %arg5: memref<1x32xf32, #tpu.memory_space<vmem>>, %arg6: memref<32x2xf32, #tpu.memory_space<vmem>>, %arg7: memref<1x2xf32, #tpu.memory_space<vmem>>, %arg8: memref<2x2xf32, #tpu.memory_space<vmem>>) attributes {dimension_semantics = [], scalar_prefetch = 0 : i64, scratch_operands = 0 : i64, tpu.core_type = #tpu.core_type<tc>} {
    %c0 = arith.constant 0 : index
    %c0_0 = arith.constant 0 : index
    %0 = vector.load %arg0[%c0, %c0_0] : memref<2x89xf32, #tpu.memory_space<vmem>>, vector<2x89xf32>
    %c0_1 = arith.constant 0 : index
    %c0_2 = arith.constant 0 : index
    %1 = vector.load %arg1[%c0_1, %c0_2] : memref<89x336xf32, #tpu.memory_space<vmem>>, vector<89x336xf32>
    %cst = arith.constant dense<0.000000e+00> : vector<2x336xf32>
    %2 = tpu.matmul %0, %1, %cst {dimension_numbers = #tpu.dot_dimension_numbers<[1], [0], [0], [1], [0, 0, 1, 1], [], []>} : vector<2x89xf32>, vector<89x336xf32>, vector<2x336xf32> -> vector<2x336xf32>
    %cst_3 = arith.constant 0.000000e+00 : f32
    %3 = vector.broadcast %cst_3 : f32 to vector<2x336xf32>
    %4 = arith.maximumf %2, %3 : vector<2x336xf32>
    %5 = vector.extract_strided_slice %4 {offsets = [0, 0], sizes = [2, 335], strides = [1, 1]} : vector<2x336xf32> to vector<2x335xf32>
    %6 = vector.extract_strided_slice %4 {offsets = [0, 1], sizes = [2, 335], strides = [1, 1]} : vector<2x336xf32> to vector<2x335xf32>
    %7 = arith.maximumf %5, %6 : vector<2x335xf32>
    %c0_4 = arith.constant 0 : index
    %c0_5 = arith.constant 0 : index
    %8 = vector.load %arg2[%c0_4, %c0_5] : memref<335x304xf32, #tpu.memory_space<vmem>>, vector<335x304xf32>
    %cst_6 = arith.constant dense<0.000000e+00> : vector<2x304xf32>
    %9 = tpu.matmul %7, %8, %cst_6 {dimension_numbers = #tpu.dot_dimension_numbers<[1], [0], [0], [1], [0, 0, 1, 1], [], []>} : vector<2x335xf32>, vector<335x304xf32>, vector<2x304xf32> -> vector<2x304xf32>
    %c0_7 = arith.constant 0 : index
    %c0_8 = arith.constant 0 : index
    %10 = vector.load %arg3[%c0_7, %c0_8] : memref<1x304xf32, #tpu.memory_space<vmem>>, vector<1x304xf32>
    %11 = vector.broadcast %10 : vector<1x304xf32> to vector<2x304xf32>
    %12 = arith.addf %9, %11 : vector<2x304xf32>
    %cst_9 = arith.constant 0.000000e+00 : f32
    %13 = vector.broadcast %cst_9 : f32 to vector<2x304xf32>
    %14 = arith.maximumf %12, %13 : vector<2x304xf32>
    %15 = vector.extract_strided_slice %14 {offsets = [0, 0], sizes = [2, 303], strides = [1, 1]} : vector<2x304xf32> to vector<2x303xf32>
    %16 = vector.extract_strided_slice %14 {offsets = [0, 1], sizes = [2, 303], strides = [1, 1]} : vector<2x304xf32> to vector<2x303xf32>
    %17 = arith.maximumf %15, %16 : vector<2x303xf32>
    %c0_10 = arith.constant 0 : index
    %c0_11 = arith.constant 0 : index
    %18 = vector.load %arg4[%c0_10, %c0_11] : memref<303x32xf32, #tpu.memory_space<vmem>>, vector<303x32xf32>
    %cst_12 = arith.constant dense<0.000000e+00> : vector<2x32xf32>
    %19 = tpu.matmul %17, %18, %cst_12 {dimension_numbers = #tpu.dot_dimension_numbers<[1], [0], [0], [1], [0, 0, 1, 1], [], []>} : vector<2x303xf32>, vector<303x32xf32>, vector<2x32xf32> -> vector<2x32xf32>
    %c0_13 = arith.constant 0 : index
    %c0_14 = arith.constant 0 : index
    %20 = vector.load %arg5[%c0_13, %c0_14] : memref<1x32xf32, #tpu.memory_space<vmem>>, vector<1x32xf32>
    %21 = vector.broadcast %20 : vector<1x32xf32> to vector<2x32xf32>
    %22 = arith.addf %19, %21 : vector<2x32xf32>
    %cst_15 = arith.constant 0.000000e+00 : f32
    %23 = vector.broadcast %cst_15 : f32 to vector<2x32xf32>
    %24 = arith.maximumf %22, %23 : vector<2x32xf32>
    %c0_16 = arith.constant 0 : index
    %c0_17 = arith.constant 0 : index
    %25 = vector.load %arg6[%c0_16, %c0_17] : memref<32x2xf32, #tpu.memory_space<vmem>>, vector<32x2xf32>
    %cst_18 = arith.constant dense<0.000000e+00> : vector<2x2xf32>
    %26 = tpu.matmul %24, %25, %cst_18 {dimension_numbers = #tpu.dot_dimension_numbers<[1], [0], [0], [1], [0, 0, 1, 1], [], []>} : vector<2x32xf32>, vector<32x2xf32>, vector<2x2xf32> -> vector<2x2xf32>
    %c0_19 = arith.constant 0 : index
    %c0_20 = arith.constant 0 : index
    %27 = vector.load %arg7[%c0_19, %c0_20] : memref<1x2xf32, #tpu.memory_space<vmem>>, vector<1x2xf32>
    %28 = vector.broadcast %27 : vector<1x2xf32> to vector<2x2xf32>
    %29 = arith.addf %26, %28 : vector<2x2xf32>
    %c0_21 = arith.constant 0 : index
    %c0_22 = arith.constant 0 : index
    %30 = vector.load %arg8[%c0_21, %c0_22] : memref<2x2xf32, #tpu.memory_space<vmem>>, vector<2x2xf32>
    tpu.vector_store %arg8[%c0_21, %c0_22], %29 {strides = array<i32>} : memref<2x2xf32, #tpu.memory_space<vmem>>, vector<2x2xf32>,
    return
  }
}

</mosaic_0001>

<llo_original>
// kernel: tpu_custom_call.1
$region0: #{tpu_custom_call.1}
  #allocation0 [shape = 'u32[]', space=smem, size = 0x4, offset = 0x4, fixed_abs, tag = 'smem constant byte address 0x4 - core index']
  #allocation1 [shape = 'u32[144,128]{1,0:T(1,128)}', space=vmem, size = 0x12000, scoped, tag = 'internal scratch']
  %s0 = inlined_call_operand.vmem [shape: f32[2,89], index: 0, kind: input, shape index: {}]
  %s1 = inlined_call_operand.vmem [shape: f32[89,336], index: 1, kind: input, shape index: {}]
  %s2 = inlined_call_operand.vmem [shape: f32[335,304], index: 2, kind: input, shape index: {}]
  %s3 = inlined_call_operand.vmem [shape: f32[1,304], index: 3, kind: input, shape index: {}]
  %s4 = inlined_call_operand.vmem [shape: f32[303,32], index: 4, kind: input, shape index: {}]
  %s5 = inlined_call_operand.vmem [shape: f32[1,32], index: 5, kind: input, shape index: {}]
  %s6 = inlined_call_operand.vmem [shape: f32[32,2], index: 6, kind: input, shape index: {}]
  %s7 = inlined_call_operand.vmem [shape: f32[1,2], index: 7, kind: input, shape index: {}]
  %s8 = inlined_call_operand.hbm [shape: f32[2,2], index: 8, kind: output, shape index: {}]
  %s9 = sld [smem:[#allocation0]]
  $region42: #{tpu_custom_call.1} parent=0
    _
  %s11 = ssub.s32 1, %s9
  %s12 = scalar_select 0, %s11, %s9
  $region1: #{tpu_custom_call.1} parent=0
    #allocation2 [shape = 'u8[1024]{0}', space=vmem, size = 0x400, scoped, tag = 'output window, operand 0, single buffered']
    #allocation3 [shape = 's32[1]{0}', space=sflag, size = 0x4, scoped, tag = 'scoped memory for tpu_custom_call.1']
    %13 = vsyncpa [#allocation3], 0
    // Predicated region
    $region2: #{tpu_custom_call.1} parent=1 // pred_check
      _
    $region3: #{tpu_custom_call.1} parent=1 // pred_check_branch
      %15 = sbr.rel (0) target = $region5
    $region4: #{tpu_custom_call.1} parent=1 // pred_region
      _
    $region5: #{tpu_custom_call.1} parent=1 // pred_fallthru
      _
    // Predicated region
    $region6: #{tpu_custom_call.1} parent=1 // pred_check
      _
    $region7: #{tpu_custom_call.1} parent=1 // pred_check_branch
      %17 = sbr.rel (0) target = $region9
    $region8: #{tpu_custom_call.1} parent=1 // pred_region
      _
    $region9: #{tpu_custom_call.1} parent=1 // pred_fallthru
      _
    // Predicated region
    $region10: #{tpu_custom_call.1} parent=1 // pred_check
      _
    $region11: #{tpu_custom_call.1} parent=1 // pred_check_branch
      %19 = sbr.rel (0) target = $region13
    $region12: #{tpu_custom_call.1} parent=1 // pred_region
      _
    $region13: #{tpu_custom_call.1} parent=1 // pred_fallthru
      _
    // Predicated region
    $region14: #{tpu_custom_call.1} parent=1 // pred_check
      _
    $region15: #{tpu_custom_call.1} parent=1 // pred_check_branch
      %21 = sbr.rel (0) target = $region17
    $region16: #{tpu_custom_call.1} parent=1 // pred_region
      _
    $region17: #{tpu_custom_call.1} parent=1 // pred_fallthru
      _
    // Predicated region
    $region18: #{tpu_custom_call.1} parent=1 // pred_check
      _
    $region19: #{tpu_custom_call.1} parent=1 // pred_check_branch
      %23 = sbr.rel (0) target = $region21
    $region20: #{tpu_custom_call.1} parent=1 // pred_region
      _
    $region21: #{tpu_custom_call.1} parent=1 // pred_fallthru
      _
    // Predicated region
    $region22: #{tpu_custom_call.1} parent=1 // pred_check
      _
    $region23: #{tpu_custom_call.1} parent=1 // pred_check_branch
      %25 = sbr.rel (0) target = $region25
    $region24: #{tpu_custom_call.1} parent=1 // pred_region
      _
    $region25: #{tpu_custom_call.1} parent=1 // pred_fallthru
      _
    // Predicated region
    $region26: #{tpu_custom_call.1} parent=1 // pred_check
      _
    $region27: #{tpu_custom_call.1} parent=1 // pred_check_branch
      %27 = sbr.rel (0) target = $region29
    $region28: #{tpu_custom_call.1} parent=1 // pred_region
      _
    $region29: #{tpu_custom_call.1} parent=1 // pred_fallthru
      _
    // Predicated region
    $region30: #{tpu_custom_call.1} parent=1 // pred_check
      _
    $region31: #{tpu_custom_call.1} parent=1 // pred_check_branch
      %29 = sbr.rel (0) target = $region33
    $region32: #{tpu_custom_call.1} parent=1 // pred_region
      _
    $region33: #{tpu_custom_call.1} parent=1 // pred_fallthru
      _
    %v30 = vld [vmem:[%s0] sm:$0x3]
    %v31 = vld [vmem:[%s1] sm:$0xff]
    %v32 = vld [vmem:[%s1 + $0x8] sm:$0xff]
    %v33 = vld [vmem:[%s1 + $0x10] sm:$0xff]
    %v34 = vld [vmem:[%s1 + $0x18] sm:$0xff]
    %v35 = vld [vmem:[%s1 + $0x20] sm:$0xff]
    %v36 = vld [vmem:[%s1 + $0x28] sm:$0xff]
    %v37 = vld [vmem:[%s1 + $0x30] sm:$0xff]
    %v38 = vld [vmem:[%s1 + $0x38] sm:$0xff]
    %v39 = vld [vmem:[%s1 + $0x40] sm:$0xff]
    %v40 = vld [vmem:[%s1 + $0x48] sm:$0xff]
    %v41 = vld [vmem:[%s1 + $0x50] sm:$0xff]
    %v42 = vld [vmem:[%s1 + $0x58] sm:$0xff]
    %v43 = vld [vmem:[%s1 + $0x60] sm:$0xff]
    %v44 = vld [vmem:[%s1 + $0x68] sm:$0xff]
    %v45 = vld [vmem:[%s1 + $0x70] sm:$0xff]
    %v46 = vld [vmem:[%s1 + $0x78] sm:$0xff]
    %v47 = vld [vmem:[%s1 + $0x80] sm:$0xff]
    %v48 = vld [vmem:[%s1 + $0x88] sm:$0xff]
    %v49 = vld [vmem:[%s1 + $0x90] sm:$0xff]
    %v50 = vld [vmem:[%s1 + $0x98] sm:$0xff]
    %v51 = vld [vmem:[%s1 + $0xa0] sm:$0xff]
    %v52 = vld [vmem:[%s1 + $0xa8] sm:$0xff]
    %v53 = vld [vmem:[%s1 + $0xb0] sm:$0xff]
    %v54 = vld [vmem:[%s1 + $0xb8] sm:$0xff]
    %v55 = vld [vmem:[%s1 + $0xc0] sm:$0xff]
    %v56 = vld [vmem:[%s1 + $0xc8] sm:$0xff]
    %v57 = vld [vmem:[%s1 + $0xd0] sm:$0xff]
    %v58 = vld [vmem:[%s1 + $0xd8] sm:$0xff]
    %v59 = vld [vmem:[%s1 + $0xe0] sm:$0xff]
    %v60 = vld [vmem:[%s1 + $0xe8] sm:$0xff]
    %v61 = vld [vmem:[%s1 + $0xf0] sm:$0xff]
    %v62 = vld [vmem:[%s1 + $0xf8] sm:$0xff]
    %v63 = vld [vmem:[%s1 + $0x100] sm:$0xff]
    %v64 = vld [vmem:[%s1 + $0x108] sm:$0x1]
    %v65 = vld [vmem:[%s1 + $0x110] sm:$0x1]
    %v66 = vld [vmem:[%s1 + $0x118] sm:$0x1]
    %vm67 = vcmask 728064
    %v69 = vsel %vm67, %v30, 0
    %vm71 = vcmask 1040384
    %v73 = vsel %vm71, %v64, 0
    %v76 = vsel %vm71, %v65, 0
    %v79 = vsel %vm71, %v66, 0
    %81 = vmatprep.subr.mxu0 %v32
    %82 = vmatpush1.msra.mxu0 %v31
    %83 = vmatprep.subr.mxu0 %v35
    %84 = vmatpush1.msra.mxu0 %v34
    %85 = vmatprep.subr.mxu0 %v38
    %86 = vmatpush1.msra.mxu0 %v37
    %87 = vmatprep.subr.mxu0 %v41
    %88 = vmatpush1.msra.mxu0 %v40
    %89 = vmatprep.subr.mxu0 %v44
    %90 = vmatpush1.msra.mxu0 %v43
    %91 = vmatprep.subr.mxu0 %v47
    %92 = vmatpush1.msra.mxu0 %v46
    %93 = vmatprep.subr.mxu0 %v50
    %94 = vmatpush1.msra.mxu0 %v49
    %95 = vmatprep.subr.mxu0 %v53
    %96 = vmatpush1.msra.mxu0 %v52
    %97 = vmatprep.subr.mxu0 %v56
    %98 = vmatpush1.msra.mxu0 %v55
    %99 = vmatprep.subr.mxu0 %v59
    %100 = vmatpush1.msra.mxu0 %v58
    %101 = vmatprep.subr.mxu0 %v62
    %102 = vmatpush1.msra.mxu0 %v61
    %103 = vmatprep.subr.mxu0 %v76
    %104 = vmatpush1.msra.mxu0 %v73
    %105 = vmatprep.subr.mxu0 0.0
    %106 = vmatpush1.msra.mxu0 0.0
    %107 = vmatprep.subr.mxu0 0.0
    %108 = vmatpush1.msra.mxu0 0.0
    %109 = vmatprep.subr.mxu0 0.0
    %110 = vmatpush1.msra.mxu0 0.0
    %111 = vmatprep.subr.mxu0 0.0
    %112 = vmatpush1.msra.mxu0 0.0
    %113 = vmatprep.subr.mxu0 0.0
    %114 = vmatpush1.msra.mxu0 0.0
    %115 = vmatprep.subr.mxu0 0.0
    %116 = vmatpush1.msra.mxu0 0.0
    %117 = vmatprep.subr.mxu0 0.0
    %118 = vmatpush1.msra.mxu0 0.0
    %119 = vmatprep.subr.mxu0 0.0
    %120 = vmatpush1.msra.mxu0 0.0
    %121 = vmatprep.subr.mxu0 0.0
    %122 = vmatpush1.msra.mxu0 0.0
    %123 = vmatprep.subr.mxu0 0.0
    %124 = vmatpush1.msra.mxu0 0.0
    %125 = vmatprep.subr.mxu0 0.0
    %126 = vmatpush1.msra.mxu0 0.0
    %127 = vmatprep.subr.mxu0 0.0
    %128 = vmatpush1.msra.mxu0 0.0
    %129 = vmatprep.subr.mxu0 0.0
    %130 = vmatpush1.msra.mxu0 0.0
    %131 = vmatprep.subr.mxu0 0.0
    %132 = vmatpush1.msra.mxu0 0.0
    %133 = vmatprep.subr.mxu0 0.0
    %134 = vmatpush1.msra.mxu0 0.0
    %135 = vmatprep.subr.mxu0 0.0
    %136 = vmatpush1.msra.mxu0 0.0
    %137 = vmatprep.subr.mxu0 0.0
    %138 = vmatpush1.msra.mxu0 0.0
    %139 = vmatprep.subr.mxu0 0.0
    %140 = vmatpush1.msra.mxu0 0.0
    %141 = vmatprep.subr.mxu0 0.0
    %142 = vmatpush1.msra.mxu0 0.0
    %143 = vmatprep.subr.mxu0 0.0
    %144 = vmatpush1.msra.mxu0 0.0
    %145 = vmatprep.mubr.f32.mxu0 0.0
    %146 = vmatmul.mubr.f32.gmra.mrb[0].mxu0 %v69
    %v147 = vpop.f32.mrb[0].mxu0
    %v148 = vadd.f32 0.0, %v147
    %v149 = vpop.f32.mrb[0].mxu0
    %v150 = vadd.f32 0.0, %v149
    %151 = vdwg.mxu0
    %152 = vmatprep.subr.mxu0 0.0
    %153 = vmatpush1.msra.mxu0 %v33
    %154 = vmatprep.subr.mxu0 0.0
    %155 = vmatpush1.msra.mxu0 %v36
    %156 = vmatprep.subr.mxu0 0.0
    %157 = vmatpush1.msra.mxu0 %v39
    %158 = vmatprep.subr.mxu0 0.0
    %159 = vmatpush1.msra.mxu0 %v42
    %160 = vmatprep.subr.mxu0 0.0
    %161 = vmatpush1.msra.mxu0 %v45
    %162 = vmatprep.subr.mxu0 0.0
    %163 = vmatpush1.msra.mxu0 %v48
    %164 = vmatprep.subr.mxu0 0.0
    %165 = vmatpush1.msra.mxu0 %v51
    %166 = vmatprep.subr.mxu0 0.0
    %167 = vmatpush1.msra.mxu0 %v54
    %168 = vmatprep.subr.mxu0 0.0
    %169 = vmatpush1.msra.mxu0 %v57
    %170 = vmatprep.subr.mxu0 0.0
    %171 = vmatpush1.msra.mxu0 %v60
    %172 = vmatprep.subr.mxu0 0.0
    %173 = vmatpush1.msra.mxu0 %v63
    %174 = vmatprep.subr.mxu0 0.0
    %175 = vmatpush1.msra.mxu0 %v79
    %176 = vmatprep.subr.mxu0 0.0
    %177 = vmatpush1.msra.mxu0 0.0
    %178 = vmatprep.subr.mxu0 0.0
    %179 = vmatpush1.msra.mxu0 0.0
    %180 = vmatprep.subr.mxu0 0.0
    %181 = vmatpush1.msra.mxu0 0.0
    %182 = vmatprep.subr.mxu0 0.0
    %183 = vmatpush1.msra.mxu0 0.0
    %184 = vmatprep.subr.mxu0 0.0
    %185 = vmatpush1.msra.mxu0 0.0
    %186 = vmatprep.subr.mxu0 0.0
    %187 = vmatpush1.msra.mxu0 0.0
    %188 = vmatprep.subr.mxu0 0.0
    %189 = vmatpush1.msra.mxu0 0.0
    %190 = vmatprep.subr.mxu0 0.0
    %191 = vmatpush1.msra.mxu0 0.0
    %192 = vmatprep.subr.mxu0 0.0
    %193 = vmatpush1.msra.mxu0 0.0
    %194 = vmatprep.subr.mxu0 0.0
    %195 = vmatpush1.msra.mxu0 0.0
    %196 = vmatprep.subr.mxu0 0.0
    %197 = vmatpush1.msra.mxu0 0.0
    %198 = vmatprep.subr.mxu0 0.0
    %199 = vmatpush1.msra.mxu0 0.0
    %200 = vmatprep.subr.mxu0 0.0
    %201 = vmatpush1.msra.mxu0 0.0
    %202 = vmatprep.subr.mxu0 0.0
    %203 = vmatpush1.msra.mxu0 0.0
    %204 = vmatprep.subr.mxu0 0.0
    %205 = vmatpush1.msra.mxu0 0.0
    %206 = vmatprep.subr.mxu0 0.0
    %207 = vmatpush1.msra.mxu0 0.0
    %208 = vmatprep.subr.mxu0 0.0
    %209 = vmatpush1.msra.mxu0 0.0
    %210 = vmatprep.subr.mxu0 0.0
    %211 = vmatpush1.msra.mxu0 0.0
    %212 = vmatprep.subr.mxu0 0.0
    %213 = vmatpush1.msra.mxu0 0.0
    %214 = vmatprep.subr.mxu0 0.0
    %215 = vmatpush1.msra.mxu0 0.0
    %216 = vmatprep.mubr.f32.mxu0 0.0
    %217 = vmatmul.mubr.f32.gmra.mrb[0].mxu0 %v69
    %v218 = vpop.f32.mrb[0].mxu0
    %v219 = vadd.f32 0.0, %v218
    %v220 = vpop.f32.mrb[0].mxu0
    %221 = vdwg.mxu0
    %v222 = vmax.f32 %v148, 0.0
    %v223 = vmax.f32 %v150, 0.0
    %v224 = vmax.f32 %v219, 0.0
    %228 = vrot.lane.b32.xlu0 %v222, 127
    %v229 = vpop.permute.xlu0 %228
    %230 = vrot.lane.b32.xlu0 %v223, 127
    %v231 = vpop.permute.xlu0 %230
    %232 = vrot.lane.b32.xlu0 %v224, 127
    %v233 = vpop.permute.xlu0 %232
    %vm234 = vcmask 1039360
    %v235 = vsel %vm234, %v229, %v231
    %v236 = vsel %vm234, %v231, %v233
    %v240 = vmax.f32 %v222, %v235
    %v241 = vmax.f32 %v223, %v236
    %v242 = vmax.f32 %v224, %v233
    %v243 = vld [vmem:[%s2] sm:$0xff]
    %v244 = vld [vmem:[%s2 + $0x8] sm:$0xff]
    %v245 = vld [vmem:[%s2 + $0x10] sm:$0xff]
    %v246 = vld [vmem:[%s2 + $0x18] sm:$0xff]
    %v247 = vld [vmem:[%s2 + $0x20] sm:$0xff]
    %v248 = vld [vmem:[%s2 + $0x28] sm:$0xff]
    %v249 = vld [vmem:[%s2 + $0x30] sm:$0xff]
    %v250 = vld [vmem:[%s2 + $0x38] sm:$0xff]
    %v251 = vld [vmem:[%s2 + $0x40] sm:$0xff]
    %v252 = vld [vmem:[%s2 + $0x48] sm:$0xff]
    %v253 = vld [vmem:[%s2 + $0x50] sm:$0xff]
    %v254 = vld [vmem:[%s2 + $0x58] sm:$0xff]
    %v255 = vld [vmem:[%s2 + $0x60] sm:$0xff]
    %v256 = vld [vmem:[%s2 + $0x68] sm:$0xff]
    %v257 = vld [vmem:[%s2 + $0x70] sm:$0xff]
    %v258 = vld [vmem:[%s2 + $0x78] sm:$0xff]
    %v259 = vld [vmem:[%s2 + $0x80] sm:$0xff]
    %v260 = vld [vmem:[%s2 + $0x88] sm:$0xff]
    %v261 = vld [vmem:[%s2 + $0x90] sm:$0xff]
    %v262 = vld [vmem:[%s2 + $0x98] sm:$0xff]
    %v263 = vld [vmem:[%s2 + $0xa0] sm:$0xff]
    %v264 = vld [vmem:[%s2 + $0xa8] sm:$0xff]
    %v265 = vld [vmem:[%s2 + $0xb0] sm:$0xff]
    %v266 = vld [vmem:[%s2 + $0xb8] sm:$0xff]
    %v267 = vld [vmem:[%s2 + $0xc0] sm:$0xff]
    %v268 = vld [vmem:[%s2 + $0xc8] sm:$0xff]
    %v269 = vld [vmem:[%s2 + $0xd0] sm:$0xff]
    %v270 = vld [vmem:[%s2 + $0xd8] sm:$0xff]
    %v271 = vld [vmem:[%s2 + $0xe0] sm:$0xff]
    %v272 = vld [vmem:[%s2 + $0xe8] sm:$0xff]
    %v273 = vld [vmem:[%s2 + $0xf0] sm:$0xff]
    %v274 = vld [vmem:[%s2 + $0xf8] sm:$0xff]
    %v275 = vld [vmem:[%s2 + $0x100] sm:$0xff]
    %v276 = vld [vmem:[%s2 + $0x108] sm:$0xff]
    %v277 = vld [vmem:[%s2 + $0x110] sm:$0xff]
    %v278 = vld [vmem:[%s2 + $0x118] sm:$0xff]
    %v279 = vld [vmem:[%s2 + $0x120] sm:$0xff]
    %v280 = vld [vmem:[%s2 + $0x128] sm:$0xff]
    %v281 = vld [vmem:[%s2 + $0x130] sm:$0xff]
    %v282 = vld [vmem:[%s2 + $0x138] sm:$0xff]
    %v283 = vld [vmem:[%s2 + $0x140] sm:$0xff]
    %v284 = vld [vmem:[%s2 + $0x148] sm:$0xff]
    %v285 = vld [vmem:[%s2 + $0x150] sm:$0xff]
    %v286 = vld [vmem:[%s2 + $0x158] sm:$0xff]
    %v287 = vld [vmem:[%s2 + $0x160] sm:$0xff]
    %v288 = vld [vmem:[%s2 + $0x168] sm:$0xff]
    %v289 = vld [vmem:[%s2 + $0x170] sm:$0xff]
    %v290 = vld [vmem:[%s2 + $0x178] sm:$0xff]
    %v291 = vld [vmem:[%s2 + $0x180] sm:$0xff]
    %v292 = vld [vmem:[%s2 + $0x188] sm:$0xff]
    %v293 = vld [vmem:[%s2 + $0x190] sm:$0xff]
    %v294 = vld [vmem:[%s2 + $0x198] sm:$0xff]
    %v295 = vld [vmem:[%s2 + $0x1a0] sm:$0xff]
    %v296 = vld [vmem:[%s2 + $0x1a8] sm:$0xff]
    %v297 = vld [vmem:[%s2 + $0x1b0] sm:$0xff]
    %v298 = vld [vmem:[%s2 + $0x1b8] sm:$0xff]
    %v299 = vld [vmem:[%s2 + $0x1c0] sm:$0xff]
    %v300 = vld [vmem:[%s2 + $0x1c8] sm:$0xff]
    %v301 = vld [vmem:[%s2 + $0x1d0] sm:$0xff]
    %v302 = vld [vmem:[%s2 + $0x1d8] sm:$0xff]
    %v303 = vld [vmem:[%s2 + $0x1e0] sm:$0xff]
    %v304 = vld [vmem:[%s2 + $0x1e8] sm:$0xff]
    %v305 = vld [vmem:[%s2 + $0x1f0] sm:$0xff]
    %v306 = vld [vmem:[%s2 + $0x1f8] sm:$0xff]
    %v307 = vld [vmem:[%s2 + $0x200] sm:$0xff]
    %v308 = vld [vmem:[%s2 + $0x208] sm:$0xff]
    %v309 = vld [vmem:[%s2 + $0x210] sm:$0xff]
    %v310 = vld [vmem:[%s2 + $0x218] sm:$0xff]
    %v311 = vld [vmem:[%s2 + $0x220] sm:$0xff]
    %v312 = vld [vmem:[%s2 + $0x228] sm:$0xff]
    %v313 = vld [vmem:[%s2 + $0x230] sm:$0xff]
    %v314 = vld [vmem:[%s2 + $0x238] sm:$0xff]
    %v315 = vld [vmem:[%s2 + $0x240] sm:$0xff]
    %v316 = vld [vmem:[%s2 + $0x248] sm:$0xff]
    %v317 = vld [vmem:[%s2 + $0x250] sm:$0xff]
    %v318 = vld [vmem:[%s2 + $0x258] sm:$0xff]
    %v319 = vld [vmem:[%s2 + $0x260] sm:$0xff]
    %v320 = vld [vmem:[%s2 + $0x268] sm:$0xff]
    %v321 = vld [vmem:[%s2 + $0x270] sm:$0xff]
    %v322 = vld [vmem:[%s2 + $0x278] sm:$0xff]
    %v323 = vld [vmem:[%s2 + $0x280] sm:$0xff]
    %v324 = vld [vmem:[%s2 + $0x288] sm:$0xff]
    %v325 = vld [vmem:[%s2 + $0x290] sm:$0xff]
    %v326 = vld [vmem:[%s2 + $0x298] sm:$0xff]
    %v327 = vld [vmem:[%s2 + $0x2a0] sm:$0xff]
    %v328 = vld [vmem:[%s2 + $0x2a8] sm:$0xff]
    %v329 = vld [vmem:[%s2 + $0x2b0] sm:$0xff]
    %v330 = vld [vmem:[%s2 + $0x2b8] sm:$0xff]
    %v331 = vld [vmem:[%s2 + $0x2c0] sm:$0xff]
    %v332 = vld [vmem:[%s2 + $0x2c8] sm:$0xff]
    %v333 = vld [vmem:[%s2 + $0x2d0] sm:$0xff]
    %v334 = vld [vmem:[%s2 + $0x2d8] sm:$0xff]
    %v335 = vld [vmem:[%s2 + $0x2e0] sm:$0xff]
    %v336 = vld [vmem:[%s2 + $0x2e8] sm:$0xff]
    %v337 = vld [vmem:[%s2 + $0x2f0] sm:$0xff]
    %v338 = vld [vmem:[%s2 + $0x2f8] sm:$0xff]
    %v339 = vld [vmem:[%s2 + $0x300] sm:$0xff]
    %v340 = vld [vmem:[%s2 + $0x308] sm:$0xff]
    %v341 = vld [vmem:[%s2 + $0x310] sm:$0xff]
    %v342 = vld [vmem:[%s2 + $0x318] sm:$0xff]
    %v343 = vld [vmem:[%s2 + $0x320] sm:$0xff]
    %v344 = vld [vmem:[%s2 + $0x328] sm:$0xff]
    %v345 = vld [vmem:[%s2 + $0x330] sm:$0xff]
    %v346 = vld [vmem:[%s2 + $0x338] sm:$0xff]
    %v347 = vld [vmem:[%s2 + $0x340] sm:$0xff]
    %v348 = vld [vmem:[%s2 + $0x348] sm:$0xff]
    %v349 = vld [vmem:[%s2 + $0x350] sm:$0xff]
    %v350 = vld [vmem:[%s2 + $0x358] sm:$0xff]
    %v351 = vld [vmem:[%s2 + $0x360] sm:$0xff]
    %v352 = vld [vmem:[%s2 + $0x368] sm:$0xff]
    %v353 = vld [vmem:[%s2 + $0x370] sm:$0xff]
    %v354 = vld [vmem:[%s2 + $0x378] sm:$0xff]
    %v355 = vld [vmem:[%s2 + $0x380] sm:$0xff]
    %v356 = vld [vmem:[%s2 + $0x388] sm:$0xff]
    %v357 = vld [vmem:[%s2 + $0x390] sm:$0xff]
    %v358 = vld [vmem:[%s2 + $0x398] sm:$0xff]
    %v359 = vld [vmem:[%s2 + $0x3a0] sm:$0xff]
    %v360 = vld [vmem:[%s2 + $0x3a8] sm:$0xff]
    %v361 = vld [vmem:[%s2 + $0x3b0] sm:$0xff]
    %v362 = vld [vmem:[%s2 + $0x3b8] sm:$0xff]
    %v363 = vld [vmem:[%s2 + $0x3c0] sm:$0xff]
    %v364 = vld [vmem:[%s2 + $0x3c8] sm:$0xff]
    %v365 = vld [vmem:[%s2 + $0x3d0] sm:$0xff]
    %v366 = vld [vmem:[%s2 + $0x3d8] sm:$0x7f]
    %v367 = vld [vmem:[%s2 + $0x3e0] sm:$0x7f]
    %v368 = vld [vmem:[%s2 + $0x3e8] sm:$0x7f]
    %v369 = vld [vmem:[%s3] sm:$0x7]
    %v371 = vlaneseq
    %v372 = vshrl.u32 %v371, 7
    %v373 = vsub.s32 0, %v372
    %v374 = vrot.slane %v369, %v373
    %v375 = vlaneseq
    %v376 = vshrl.u32 %v375, 7
    %v377 = vsub.s32 1, %v376
    %v378 = vrot.slane %v369, %v377
    %v379 = vlaneseq
    %v380 = vshrl.u32 %v379, 7
    %v381 = vsub.s32 2, %v380
    %v382 = vrot.slane %v369, %v381
    %vm386 = vcmask 646144
    %v388 = vsel %vm386, %v242, 0
    %vm390 = vcmask 1046528
    %v392 = vsel %vm390, %v366, 0
    %v395 = vsel %vm390, %v367, 0
    %v398 = vsel %vm390, %v368, 0
    %400 = vmatprep.subr.mxu0 %v244
    %401 = vmatpush1.msra.mxu0 %v243
    %402 = vmatprep.subr.mxu0 %v247
    %403 = vmatpush1.msra.mxu0 %v246
    %404 = vmatprep.subr.mxu0 %v250
    %405 = vmatpush1.msra.mxu0 %v249
    %406 = vmatprep.subr.mxu0 %v253
    %407 = vmatpush1.msra.mxu0 %v252
    %408 = vmatprep.subr.mxu0 %v256
    %409 = vmatpush1.msra.mxu0 %v255
    %410 = vmatprep.subr.mxu0 %v259
    %411 = vmatpush1.msra.mxu0 %v258
    %412 = vmatprep.subr.mxu0 %v262
    %413 = vmatpush1.msra.mxu0 %v261
    %414 = vmatprep.subr.mxu0 %v265
    %415 = vmatpush1.msra.mxu0 %v264
    %416 = vmatprep.subr.mxu0 %v268
    %417 = vmatpush1.msra.mxu0 %v267
    %418 = vmatprep.subr.mxu0 %v271
    %419 = vmatpush1.msra.mxu0 %v270
    %420 = vmatprep.subr.mxu0 %v274
    %421 = vmatpush1.msra.mxu0 %v273
    %422 = vmatprep.subr.mxu0 %v277
    %423 = vmatpush1.msra.mxu0 %v276
    %424 = vmatprep.subr.mxu0 %v280
    %425 = vmatpush1.msra.mxu0 %v279
    %426 = vmatprep.subr.mxu0 %v283
    %427 = vmatpush1.msra.mxu0 %v282
    %428 = vmatprep.subr.mxu0 %v286
    %429 = vmatpush1.msra.mxu0 %v285
    %430 = vmatprep.subr.mxu0 %v289
    %431 = vmatpush1.msra.mxu0 %v288
    %432 = vmatprep.subr.mxu0 %v292
    %433 = vmatpush1.msra.mxu0 %v291
    %434 = vmatprep.subr.mxu0 %v295
    %435 = vmatpush1.msra.mxu0 %v294
    %436 = vmatprep.subr.mxu0 %v298
    %437 = vmatpush1.msra.mxu0 %v297
    %438 = vmatprep.subr.mxu0 %v301
    %439 = vmatpush1.msra.mxu0 %v300
    %440 = vmatprep.subr.mxu0 %v304
    %441 = vmatpush1.msra.mxu0 %v303
    %442 = vmatprep.subr.mxu0 %v307
    %443 = vmatpush1.msra.mxu0 %v306
    %444 = vmatprep.subr.mxu0 %v310
    %445 = vmatpush1.msra.mxu0 %v309
    %446 = vmatprep.subr.mxu0 %v313
    %447 = vmatpush1.msra.mxu0 %v312
    %448 = vmatprep.subr.mxu0 %v316
    %449 = vmatpush1.msra.mxu0 %v315
    %450 = vmatprep.subr.mxu0 %v319
    %451 = vmatpush1.msra.mxu0 %v318
    %452 = vmatprep.subr.mxu0 %v322
    %453 = vmatpush1.msra.mxu0 %v321
    %454 = vmatprep.subr.mxu0 %v325
    %455 = vmatpush1.msra.mxu0 %v324
    %456 = vmatprep.subr.mxu0 %v328
    %457 = vmatpush1.msra.mxu0 %v327
    %458 = vmatprep.subr.mxu0 %v331
    %459 = vmatpush1.msra.mxu0 %v330
    %460 = vmatprep.subr.mxu0 %v334
    %461 = vmatpush1.msra.mxu0 %v333
    %462 = vmatprep.subr.mxu0 %v337
    %463 = vmatpush1.msra.mxu0 %v336
    %464 = vmatprep.mubr.f32.mxu0 %v241
    %465 = vmatmul.mubr.f32.gmra.mrb[0].mxu0 %v240
    %v466 = vpop.f32.mrb[0].mxu0
    %v467 = vadd.f32 %v374, %v466
    %v468 = vpop.f32.mrb[0].mxu0
    %v469 = vadd.f32 %v378, %v468
    %470 = vdwg.mxu0
    %471 = vmatprep.subr.mxu0 %v340
    %472 = vmatpush1.msra.mxu0 %v339
    %473 = vmatprep.subr.mxu0 %v343
    %474 = vmatpush1.msra.mxu0 %v342
    %475 = vmatprep.subr.mxu0 %v346
    %476 = vmatpush1.msra.mxu0 %v345
    %477 = vmatprep.subr.mxu0 %v349
    %478 = vmatpush1.msra.mxu0 %v348
    %479 = vmatprep.subr.mxu0 %v352
    %480 = vmatpush1.msra.mxu0 %v351
    %481 = vmatprep.subr.mxu0 %v355
    %482 = vmatpush1.msra.mxu0 %v354
    %483 = vmatprep.subr.mxu0 %v358
    %484 = vmatpush1.msra.mxu0 %v357
    %485 = vmatprep.subr.mxu0 %v361
    %486 = vmatpush1.msra.mxu0 %v360
    %487 = vmatprep.subr.mxu0 %v364
    %488 = vmatpush1.msra.mxu0 %v363
    %489 = vmatprep.subr.mxu0 %v395
    %490 = vmatpush1.msra.mxu0 %v392
    %491 = vmatprep.subr.mxu0 0.0
    %492 = vmatpush1.msra.mxu0 0.0
    %493 = vmatprep.subr.mxu0 0.0
    %494 = vmatpush1.msra.mxu0 0.0
    %495 = vmatprep.subr.mxu0 0.0
    %496 = vmatpush1.msra.mxu0 0.0
    %497 = vmatprep.subr.mxu0 0.0
    %498 = vmatpush1.msra.mxu0 0.0
    %499 = vmatprep.subr.mxu0 0.0
    %500 = vmatpush1.msra.mxu0 0.0
    %501 = vmatprep.subr.mxu0 0.0
    %502 = vmatpush1.msra.mxu0 0.0
    %503 = vmatprep.subr.mxu0 0.0
    %504 = vmatpush1.msra.mxu0 0.0
    %505 = vmatprep.subr.mxu0 0.0
    %506 = vmatpush1.msra.mxu0 0.0
    %507 = vmatprep.subr.mxu0 0.0
    %508 = vmatpush1.msra.mxu0 0.0
    %509 = vmatprep.subr.mxu0 0.0
    %510 = vmatpush1.msra.mxu0 0.0
    %511 = vmatprep.subr.mxu0 0.0
    %512 = vmatpush1.msra.mxu0 0.0
    %513 = vmatprep.subr.mxu0 0.0
    %514 = vmatpush1.msra.mxu0 0.0
    %515 = vmatprep.subr.mxu0 0.0
    %516 = vmatpush1.msra.mxu0 0.0
    %517 = vmatprep.subr.mxu0 0.0
    %518 = vmatpush1.msra.mxu0 0.0
    %519 = vmatprep.subr.mxu0 0.0
    %520 = vmatpush1.msra.mxu0 0.0
    %521 = vmatprep.subr.mxu0 0.0
    %522 = vmatpush1.msra.mxu0 0.0
    %523 = vmatprep.subr.mxu0 0.0
    %524 = vmatpush1.msra.mxu0 0.0
    %525 = vmatprep.subr.mxu0 0.0
    %526 = vmatpush1.msra.mxu0 0.0
    %527 = vmatprep.subr.mxu0 0.0
    %528 = vmatpush1.msra.mxu0 0.0
    %529 = vmatprep.subr.mxu0 0.0
    %530 = vmatpush1.msra.mxu0 0.0
    %531 = vmatprep.subr.mxu0 0.0
    %532 = vmatpush1.msra.mxu0 0.0
    %533 = vmatprep.subr.mxu0 0.0
    %534 = vmatpush1.msra.mxu0 0.0
    %535 = vmatprep.mubr.f32.mxu0 0.0
    %536 = vmatmul.mubr.f32.gmra.mrb[0].mxu0 %v388
    %v537 = vpop.f32.mrb[0].mxu0
    %v538 = vadd.f32 %v467, %v537
    %v539 = vpop.f32.mrb[0].mxu0
    %v540 = vadd.f32 %v469, %v539
    %541 = vdwg.mxu0
    %542 = vmatprep.subr.mxu0 0.0
    %543 = vmatpush1.msra.mxu0 %v245
    %544 = vmatprep.subr.mxu0 0.0
    %545 = vmatpush1.msra.mxu0 %v248
    %546 = vmatprep.subr.mxu0 0.0
    %547 = vmatpush1.msra.mxu0 %v251
    %548 = vmatprep.subr.mxu0 0.0
    %549 = vmatpush1.msra.mxu0 %v254
    %550 = vmatprep.subr.mxu0 0.0
    %551 = vmatpush1.msra.mxu0 %v257
    %552 = vmatprep.subr.mxu0 0.0
    %553 = vmatpush1.msra.mxu0 %v260
    %554 = vmatprep.subr.mxu0 0.0
    %555 = vmatpush1.msra.mxu0 %v263
    %556 = vmatprep.subr.mxu0 0.0
    %557 = vmatpush1.msra.mxu0 %v266
    %558 = vmatprep.subr.mxu0 0.0
    %559 = vmatpush1.msra.mxu0 %v269
    %560 = vmatprep.subr.mxu0 0.0
    %561 = vmatpush1.msra.mxu0 %v272
    %562 = vmatprep.subr.mxu0 0.0
    %563 = vmatpush1.msra.mxu0 %v275
    %564 = vmatprep.subr.mxu0 0.0
    %565 = vmatpush1.msra.mxu0 %v278
    %566 = vmatprep.subr.mxu0 0.0
    %567 = vmatpush1.msra.mxu0 %v281
    %568 = vmatprep.subr.mxu0 0.0
    %569 = vmatpush1.msra.mxu0 %v284
    %570 = vmatprep.subr.mxu0 0.0
    %571 = vmatpush1.msra.mxu0 %v287
    %572 = vmatprep.subr.mxu0 0.0
    %573 = vmatpush1.msra.mxu0 %v290
    %574 = vmatprep.subr.mxu0 0.0
    %575 = vmatpush1.msra.mxu0 %v293
    %576 = vmatprep.subr.mxu0 0.0
    %577 = vmatpush1.msra.mxu0 %v296
    %578 = vmatprep.subr.mxu0 0.0
    %579 = vmatpush1.msra.mxu0 %v299
    %580 = vmatprep.subr.mxu0 0.0
    %581 = vmatpush1.msra.mxu0 %v302
    %582 = vmatprep.subr.mxu0 0.0
    %583 = vmatpush1.msra.mxu0 %v305
    %584 = vmatprep.subr.mxu0 0.0
    %585 = vmatpush1.msra.mxu0 %v308
    %586 = vmatprep.subr.mxu0 0.0
    %587 = vmatpush1.msra.mxu0 %v311
    %588 = vmatprep.subr.mxu0 0.0
    %589 = vmatpush1.msra.mxu0 %v314
    %590 = vmatprep.subr.mxu0 0.0
    %591 = vmatpush1.msra.mxu0 %v317
    %592 = vmatprep.subr.mxu0 0.0
    %593 = vmatpush1.msra.mxu0 %v320
    %594 = vmatprep.subr.mxu0 0.0
    %595 = vmatpush1.msra.mxu0 %v323
    %596 = vmatprep.subr.mxu0 0.0
    %597 = vmatpush1.msra.mxu0 %v326
    %598 = vmatprep.subr.mxu0 0.0
    %599 = vmatpush1.msra.mxu0 %v329
    %600 = vmatprep.subr.mxu0 0.0
    %601 = vmatpush1.msra.mxu0 %v332
    %602 = vmatprep.subr.mxu0 0.0
    %603 = vmatpush1.msra.mxu0 %v335
    %604 = vmatprep.subr.mxu0 0.0
    %605 = vmatpush1.msra.mxu0 %v338
    %606 = vmatprep.mubr.f32.mxu0 %v241
    %607 = vmatmul.mubr.f32.gmra.mrb[0].mxu0 %v240
    %v608 = vpop.f32.mrb[0].mxu0
    %v609 = vadd.f32 %v382, %v608
    %v610 = vpop.f32.mrb[0].mxu0
    %611 = vdwg.mxu0
    %612 = vmatprep.subr.mxu0 0.0
    %613 = vmatpush1.msra.mxu0 %v341
    %614 = vmatprep.subr.mxu0 0.0
    %615 = vmatpush1.msra.mxu0 %v344
    %616 = vmatprep.subr.mxu0 0.0
    %617 = vmatpush1.msra.mxu0 %v347
    %618 = vmatprep.subr.mxu0 0.0
    %619 = vmatpush1.msra.mxu0 %v350
    %620 = vmatprep.subr.mxu0 0.0
    %621 = vmatpush1.msra.mxu0 %v353
    %622 = vmatprep.subr.mxu0 0.0
    %623 = vmatpush1.msra.mxu0 %v356
    %624 = vmatprep.subr.mxu0 0.0
    %625 = vmatpush1.msra.mxu0 %v359
    %626 = vmatprep.subr.mxu0 0.0
    %627 = vmatpush1.msra.mxu0 %v362
    %628 = vmatprep.subr.mxu0 0.0
    %629 = vmatpush1.msra.mxu0 %v365
    %630 = vmatprep.subr.mxu0 0.0
    %631 = vmatpush1.msra.mxu0 %v398
    %632 = vmatprep.subr.mxu0 0.0
    %633 = vmatpush1.msra.mxu0 0.0
    %634 = vmatprep.subr.mxu0 0.0
    %635 = vmatpush1.msra.mxu0 0.0
    %636 = vmatprep.subr.mxu0 0.0
    %637 = vmatpush1.msra.mxu0 0.0
    %638 = vmatprep.subr.mxu0 0.0
    %639 = vmatpush1.msra.mxu0 0.0
    %640 = vmatprep.subr.mxu0 0.0
    %641 = vmatpush1.msra.mxu0 0.0
    %642 = vmatprep.subr.mxu0 0.0
    %643 = vmatpush1.msra.mxu0 0.0
    %644 = vmatprep.subr.mxu0 0.0
    %645 = vmatpush1.msra.mxu0 0.0
    %646 = vmatprep.subr.mxu0 0.0
    %647 = vmatpush1.msra.mxu0 0.0
    %648 = vmatprep.subr.mxu0 0.0
    %649 = vmatpush1.msra.mxu0 0.0
    %650 = vmatprep.subr.mxu0 0.0
    %651 = vmatpush1.msra.mxu0 0.0
    %652 = vmatprep.subr.mxu0 0.0
    %653 = vmatpush1.msra.mxu0 0.0
    %654 = vmatprep.subr.mxu0 0.0
    %655 = vmatpush1.msra.mxu0 0.0
    %656 = vmatprep.subr.mxu0 0.0
    %657 = vmatpush1.msra.mxu0 0.0
    %658 = vmatprep.subr.mxu0 0.0
    %659 = vmatpush1.msra.mxu0 0.0
    %660 = vmatprep.subr.mxu0 0.0
    %661 = vmatpush1.msra.mxu0 0.0
    %662 = vmatprep.subr.mxu0 0.0
    %663 = vmatpush1.msra.mxu0 0.0
    %664 = vmatprep.subr.mxu0 0.0
    %665 = vmatpush1.msra.mxu0 0.0
    %666 = vmatprep.subr.mxu0 0.0
    %667 = vmatpush1.msra.mxu0 0.0
    %668 = vmatprep.subr.mxu0 0.0
    %669 = vmatpush1.msra.mxu0 0.0
    %670 = vmatprep.subr.mxu0 0.0
    %671 = vmatpush1.msra.mxu0 0.0
    %672 = vmatprep.subr.mxu0 0.0
    %673 = vmatpush1.msra.mxu0 0.0
    %674 = vmatprep.subr.mxu0 0.0
    %675 = vmatpush1.msra.mxu0 0.0
    %676 = vmatprep.mubr.f32.mxu0 0.0
    %677 = vmatmul.mubr.f32.gmra.mrb[0].mxu0 %v388
    %v678 = vpop.f32.mrb[0].mxu0
    %v679 = vadd.f32 %v609, %v678
    %v680 = vpop.f32.mrb[0].mxu0
    %681 = vdwg.mxu0
    %v682 = vmax.f32 %v538, 0.0
    %v683 = vmax.f32 %v540, 0.0
    %v684 = vmax.f32 %v679, 0.0
    %688 = vrot.lane.b32.xlu0 %v682, 127
    %v689 = vpop.permute.xlu0 %688
    %690 = vrot.lane.b32.xlu0 %v683, 127
    %v691 = vpop.permute.xlu0 %690
    %692 = vrot.lane.b32.xlu0 %v684, 127
    %v693 = vpop.permute.xlu0 %692
    %v694 = vsel %vm234, %v689, %v691
    %v695 = vsel %vm234, %v691, %v693
    %v699 = vmax.f32 %v682, %v694
    %v700 = vmax.f32 %v683, %v695
    %v701 = vmax.f32 %v684, %v693
    %v702 = vld [vmem:[%s4] sm:$0xff]
    %v703 = vld [vmem:[%s4 + $0x8] sm:$0xff]
    %v704 = vld [vmem:[%s4 + $0x10] sm:$0xff]
    %v705 = vld [vmem:[%s4 + $0x18] sm:$0xff]
    %v706 = vld [vmem:[%s4 + $0x20] sm:$0xff]
    %v707 = vld [vmem:[%s4 + $0x28] sm:$0xff]
    %v708 = vld [vmem:[%s4 + $0x30] sm:$0xff]
    %v709 = vld [vmem:[%s4 + $0x38] sm:$0xff]
    %v710 = vld [vmem:[%s4 + $0x40] sm:$0xff]
    %v711 = vld [vmem:[%s4 + $0x48] sm:$0xff]
    %v712 = vld [vmem:[%s4 + $0x50] sm:$0xff]
    %v713 = vld [vmem:[%s4 + $0x58] sm:$0xff]
    %v714 = vld [vmem:[%s4 + $0x60] sm:$0xff]
    %v715 = vld [vmem:[%s4 + $0x68] sm:$0xff]
    %v716 = vld [vmem:[%s4 + $0x70] sm:$0xff]
    %v717 = vld [vmem:[%s4 + $0x78] sm:$0xff]
    %v718 = vld [vmem:[%s4 + $0x80] sm:$0xff]
    %v719 = vld [vmem:[%s4 + $0x88] sm:$0xff]
    %v720 = vld [vmem:[%s4 + $0x90] sm:$0xff]
    %v721 = vld [vmem:[%s4 + $0x98] sm:$0xff]
    %v722 = vld [vmem:[%s4 + $0xa0] sm:$0xff]
    %v723 = vld [vmem:[%s4 + $0xa8] sm:$0xff]
    %v724 = vld [vmem:[%s4 + $0xb0] sm:$0xff]
    %v725 = vld [vmem:[%s4 + $0xb8] sm:$0xff]
    %v726 = vld [vmem:[%s4 + $0xc0] sm:$0xff]
    %v727 = vld [vmem:[%s4 + $0xc8] sm:$0xff]
    %v728 = vld [vmem:[%s4 + $0xd0] sm:$0xff]
    %v729 = vld [vmem:[%s4 + $0xd8] sm:$0xff]
    %v730 = vld [vmem:[%s4 + $0xe0] sm:$0xff]
    %v731 = vld [vmem:[%s4 + $0xe8] sm:$0xff]
    %v732 = vld [vmem:[%s4 + $0xf0] sm:$0xff]
    %v733 = vld [vmem:[%s4 + $0xf8] sm:$0xff]
    %v734 = vld [vmem:[%s4 + $0x100] sm:$0xff]
    %v735 = vld [vmem:[%s4 + $0x108] sm:$0xff]
    %v736 = vld [vmem:[%s4 + $0x110] sm:$0xff]
    %v737 = vld [vmem:[%s4 + $0x118] sm:$0xff]
    %v738 = vld [vmem:[%s4 + $0x120] sm:$0xff]
    %v739 = vld [vmem:[%s4 + $0x128] sm:$0x7f]
    %v740 = vld [vmem:[%s5] sm:$0x1]
    %v742 = vlaneseq
    %v743 = vshrl.u32 %v742, 7
    %v744 = vsub.s32 0, %v743
    %v745 = vrot.slane %v740, %v744
    %vm747 = vcmask 384000
    %v749 = vsel %vm747, %v701, 0
    %v752 = vsel %vm390, %v739, 0
    %754 = vmatprep.subr.mxu0 0.0
    %755 = vmatpush1.msra.mxu0 %v702
    %756 = vmatprep.subr.mxu0 0.0
    %757 = vmatpush1.msra.mxu0 %v703
    %758 = vmatprep.subr.mxu0 0.0
    %759 = vmatpush1.msra.mxu0 %v704
    %760 = vmatprep.subr.mxu0 0.0
    %761 = vmatpush1.msra.mxu0 %v705
    %762 = vmatprep.subr.mxu0 0.0
    %763 = vmatpush1.msra.mxu0 %v706
    %764 = vmatprep.subr.mxu0 0.0
    %765 = vmatpush1.msra.mxu0 %v707
    %766 = vmatprep.subr.mxu0 0.0
    %767 = vmatpush1.msra.mxu0 %v708
    %768 = vmatprep.subr.mxu0 0.0
    %769 = vmatpush1.msra.mxu0 %v709
    %770 = vmatprep.subr.mxu0 0.0
    %771 = vmatpush1.msra.mxu0 %v710
    %772 = vmatprep.subr.mxu0 0.0
    %773 = vmatpush1.msra.mxu0 %v711
    %774 = vmatprep.subr.mxu0 0.0
    %775 = vmatpush1.msra.mxu0 %v712
    %776 = vmatprep.subr.mxu0 0.0
    %777 = vmatpush1.msra.mxu0 %v713
    %778 = vmatprep.subr.mxu0 0.0
    %779 = vmatpush1.msra.mxu0 %v714
    %780 = vmatprep.subr.mxu0 0.0
    %781 = vmatpush1.msra.mxu0 %v715
    %782 = vmatprep.subr.mxu0 0.0
    %783 = vmatpush1.msra.mxu0 %v716
    %784 = vmatprep.subr.mxu0 0.0
    %785 = vmatpush1.msra.mxu0 %v717
    %786 = vmatprep.subr.mxu0 0.0
    %787 = vmatpush1.msra.mxu0 %v718
    %788 = vmatprep.subr.mxu0 0.0
    %789 = vmatpush1.msra.mxu0 %v719
    %790 = vmatprep.subr.mxu0 0.0
    %791 = vmatpush1.msra.mxu0 %v720
    %792 = vmatprep.subr.mxu0 0.0
    %793 = vmatpush1.msra.mxu0 %v721
    %794 = vmatprep.subr.mxu0 0.0
    %795 = vmatpush1.msra.mxu0 %v722
    %796 = vmatprep.subr.mxu0 0.0
    %797 = vmatpush1.msra.mxu0 %v723
    %798 = vmatprep.subr.mxu0 0.0
    %799 = vmatpush1.msra.mxu0 %v724
    %800 = vmatprep.subr.mxu0 0.0
    %801 = vmatpush1.msra.mxu0 %v725
    %802 = vmatprep.subr.mxu0 0.0
    %803 = vmatpush1.msra.mxu0 %v726
    %804 = vmatprep.subr.mxu0 0.0
    %805 = vmatpush1.msra.mxu0 %v727
    %806 = vmatprep.subr.mxu0 0.0
    %807 = vmatpush1.msra.mxu0 %v728
    %808 = vmatprep.subr.mxu0 0.0
    %809 = vmatpush1.msra.mxu0 %v729
    %810 = vmatprep.subr.mxu0 0.0
    %811 = vmatpush1.msra.mxu0 %v730
    %812 = vmatprep.subr.mxu0 0.0
    %813 = vmatpush1.msra.mxu0 %v731
    %814 = vmatprep.subr.mxu0 0.0
    %815 = vmatpush1.msra.mxu0 %v732
    %816 = vmatprep.subr.mxu0 0.0
    %817 = vmatpush1.msra.mxu0 %v733
    %818 = vmatprep.mubr.f32.mxu0 %v700
    %819 = vmatmul.mubr.f32.gmra.mrb[0].mxu0 %v699
    %v820 = vpop.f32.mrb[0].mxu0
    %v821 = vadd.f32 %v745, %v820
    %v822 = vpop.f32.mrb[0].mxu0
    %823 = vdwg.mxu0
    %824 = vmatprep.subr.mxu0 0.0
    %825 = vmatpush1.msra.mxu0 %v734
    %826 = vmatprep.subr.mxu0 0.0
    %827 = vmatpush1.msra.mxu0 %v735
    %828 = vmatprep.subr.mxu0 0.0
    %829 = vmatpush1.msra.mxu0 %v736
    %830 = vmatprep.subr.mxu0 0.0
    %831 = vmatpush1.msra.mxu0 %v737
    %832 = vmatprep.subr.mxu0 0.0
    %833 = vmatpush1.msra.mxu0 %v738
    %834 = vmatprep.subr.mxu0 0.0
    %835 = vmatpush1.msra.mxu0 %v752
    %836 = vmatprep.subr.mxu0 0.0
    %837 = vmatpush1.msra.mxu0 0.0
    %838 = vmatprep.subr.mxu0 0.0
    %839 = vmatpush1.msra.mxu0 0.0
    %840 = vmatprep.subr.mxu0 0.0
    %841 = vmatpush1.msra.mxu0 0.0
    %842 = vmatprep.subr.mxu0 0.0
    %843 = vmatpush1.msra.mxu0 0.0
    %844 = vmatprep.subr.mxu0 0.0
    %845 = vmatpush1.msra.mxu0 0.0
    %846 = vmatprep.subr.mxu0 0.0
    %847 = vmatpush1.msra.mxu0 0.0
    %848 = vmatprep.subr.mxu0 0.0
    %849 = vmatpush1.msra.mxu0 0.0
    %850 = vmatprep.subr.mxu0 0.0
    %851 = vmatpush1.msra.mxu0 0.0
    %852 = vmatprep.subr.mxu0 0.0
    %853 = vmatpush1.msra.mxu0 0.0
    %854 = vmatprep.subr.mxu0 0.0
    %855 = vmatpush1.msra.mxu0 0.0
    %856 = vmatprep.subr.mxu0 0.0
    %857 = vmatpush1.msra.mxu0 0.0
    %858 = vmatprep.subr.mxu0 0.0
    %859 = vmatpush1.msra.mxu0 0.0
    %860 = vmatprep.subr.mxu0 0.0
    %861 = vmatpush1.msra.mxu0 0.0
    %862 = vmatprep.subr.mxu0 0.0
    %863 = vmatpush1.msra.mxu0 0.0
    %864 = vmatprep.subr.mxu0 0.0
    %865 = vmatpush1.msra.mxu0 0.0
    %866 = vmatprep.subr.mxu0 0.0
    %867 = vmatpush1.msra.mxu0 0.0
    %868 = vmatprep.subr.mxu0 0.0
    %869 = vmatpush1.msra.mxu0 0.0
    %870 = vmatprep.subr.mxu0 0.0
    %871 = vmatpush1.msra.mxu0 0.0
    %872 = vmatprep.subr.mxu0 0.0
    %873 = vmatpush1.msra.mxu0 0.0
    %874 = vmatprep.subr.mxu0 0.0
    %875 = vmatpush1.msra.mxu0 0.0
    %876 = vmatprep.subr.mxu0 0.0
    %877 = vmatpush1.msra.mxu0 0.0
    %878 = vmatprep.subr.mxu0 0.0
    %879 = vmatpush1.msra.mxu0 0.0
    %880 = vmatprep.subr.mxu0 0.0
    %881 = vmatpush1.msra.mxu0 0.0
    %882 = vmatprep.subr.mxu0 0.0
    %883 = vmatpush1.msra.mxu0 0.0
    %884 = vmatprep.subr.mxu0 0.0
    %885 = vmatpush1.msra.mxu0 0.0
    %886 = vmatprep.subr.mxu0 0.0
    %887 = vmatpush1.msra.mxu0 0.0
    %888 = vmatprep.mubr.f32.mxu0 0.0
    %889 = vmatmul.mubr.f32.gmra.mrb[0].mxu0 %v749
    %v890 = vpop.f32.mrb[0].mxu0
    %v891 = vadd.f32 %v821, %v890
    %v892 = vpop.f32.mrb[0].mxu0
    %893 = vdwg.mxu0
    %v894 = vmax.f32 %v891, 0.0
    %v895 = vld [vmem:[%s6] sm:$0xff]
    %v896 = vld [vmem:[%s6 + $0x8] sm:$0xff]
    %v897 = vld [vmem:[%s6 + $0x10] sm:$0xff]
    %v898 = vld [vmem:[%s6 + $0x18] sm:$0xff]
    %v899 = vld [vmem:[%s7] sm:$0x1]
    %v901 = vlaneseq
    %v902 = vshrl.u32 %v901, 7
    %v903 = vsub.s32 0, %v902
    %v904 = vrot.slane %v899, %v903
    %vm906 = vcmask 261120
    %v908 = vsel %vm906, %v894, 0
    %910 = vmatprep.subr.mxu0 0.0
    %911 = vmatpush1.msra.mxu0 %v895
    %912 = vmatprep.subr.mxu0 0.0
    %913 = vmatpush1.msra.mxu0 %v896
    %914 = vmatprep.subr.mxu0 0.0
    %915 = vmatpush1.msra.mxu0 %v897
    %916 = vmatprep.subr.mxu0 0.0
    %917 = vmatpush1.msra.mxu0 %v898
    %918 = vmatprep.subr.mxu0 0.0
    %919 = vmatpush1.msra.mxu0 0.0
    %920 = vmatprep.subr.mxu0 0.0
    %921 = vmatpush1.msra.mxu0 0.0
    %922 = vmatprep.subr.mxu0 0.0
    %923 = vmatpush1.msra.mxu0 0.0
    %924 = vmatprep.subr.mxu0 0.0
    %925 = vmatpush1.msra.mxu0 0.0
    %926 = vmatprep.subr.mxu0 0.0
    %927 = vmatpush1.msra.mxu0 0.0
    %928 = vmatprep.subr.mxu0 0.0
    %929 = vmatpush1.msra.mxu0 0.0
    %930 = vmatprep.subr.mxu0 0.0
    %931 = vmatpush1.msra.mxu0 0.0
    %932 = vmatprep.subr.mxu0 0.0
    %933 = vmatpush1.msra.mxu0 0.0
    %934 = vmatprep.subr.mxu0 0.0
    %935 = vmatpush1.msra.mxu0 0.0
    %936 = vmatprep.subr.mxu0 0.0
    %937 = vmatpush1.msra.mxu0 0.0
    %938 = vmatprep.subr.mxu0 0.0
    %939 = vmatpush1.msra.mxu0 0.0
    %940 = vmatprep.subr.mxu0 0.0
    %941 = vmatpush1.msra.mxu0 0.0
    %942 = vmatprep.subr.mxu0 0.0
    %943 = vmatpush1.msra.mxu0 0.0
    %944 = vmatprep.subr.mxu0 0.0
    %945 = vmatpush1.msra.mxu0 0.0
    %946 = vmatprep.subr.mxu0 0.0
    %947 = vmatpush1.msra.mxu0 0.0
    %948 = vmatprep.subr.mxu0 0.0
    %949 = vmatpush1.msra.mxu0 0.0
    %950 = vmatprep.subr.mxu0 0.0
    %951 = vmatpush1.msra.mxu0 0.0
    %952 = vmatprep.subr.mxu0 0.0
    %953 = vmatpush1.msra.mxu0 0.0
    %954 = vmatprep.subr.mxu0 0.0
    %955 = vmatpush1.msra.mxu0 0.0
    %956 = vmatprep.subr.mxu0 0.0
    %957 = vmatpush1.msra.mxu0 0.0
    %958 = vmatprep.subr.mxu0 0.0
    %959 = vmatpush1.msra.mxu0 0.0
    %960 = vmatprep.subr.mxu0 0.0
    %961 = vmatpush1.msra.mxu0 0.0
    %962 = vmatprep.subr.mxu0 0.0
    %963 = vmatpush1.msra.mxu0 0.0
    %964 = vmatprep.subr.mxu0 0.0
    %965 = vmatpush1.msra.mxu0 0.0
    %966 = vmatprep.subr.mxu0 0.0
    %967 = vmatpush1.msra.mxu0 0.0
    %968 = vmatprep.subr.mxu0 0.0
    %969 = vmatpush1.msra.mxu0 0.0
    %970 = vmatprep.subr.mxu0 0.0
    %971 = vmatpush1.msra.mxu0 0.0
    %972 = vmatprep.subr.mxu0 0.0
    %973 = vmatpush1.msra.mxu0 0.0
    %974 = vmatprep.mubr.f32.mxu0 0.0
    %975 = vmatmul.mubr.f32.gmra.mrb[0].mxu0 %v908
    %v976 = vpop.f32.mrb[0].mxu0
    %v977 = vadd.f32 %v904, %v976
    %v978 = vpop.f32.mrb[0].mxu0
    %979 = vdwg.mxu0
    %vm980 = vcmask 9216
    %981 = vst.msk [vmem:[#allocation2] sm:$0x3] %vm980, %v977
    // Predicated region
    $region34: #{tpu_custom_call.1} parent=1 // pred_check
      _
    $region35: #{tpu_custom_call.1} parent=1 // pred_check_branch
      %983 = sbr.rel (0) target = $region37
    $region36: #{tpu_custom_call.1} parent=1 // pred_region
      %s985 = ssub.s32 32, 32
      %986 = vsyncadd [#allocation3], %s985
      %s988 = sshll.u32 [#allocation2], 4
      %s989 = int_to_ptr.vmem [resolvable:$true] %s988
      %991 = dma.vmem_to_hbm [thread:$0]  %s989, 32, %s8, [#allocation3]
    $region37: #{tpu_custom_call.1} parent=1 // pred_fallthru
      _
    // Predicated region
    $region38: #{tpu_custom_call.1} parent=1 // pred_check
      _
    $region39: #{tpu_custom_call.1} parent=1 // pred_check_branch
      %993 = sbr.rel (0) target = $region41
    $region40: #{tpu_custom_call.1} parent=1 // pred_region
      %994 = dma.done [#allocation3], 32
    $region41: #{tpu_custom_call.1} parent=1 // pred_fallthru
      _
    %995 = vsyncpa [#allocation3], 1

</llo_original>
